<compile_context>
chip_gen: v5e
topology: v5e:2x2
jax: 0.10.0
libtpu: 0.0.40
codegen_flags: <defaults>
</compile_context>

<pallas_src>
import functools

import jax
import jax.numpy as jnp
import numpy as np
from jax.experimental import pallas as pl
from jax.experimental.pallas import tpu as pltpu


# ----------------------------- Pallas kernel ------------------------------ #
def _fused_encode_conv_kernel(tab_ref, w_ref, o_ref, *, H, W):
    """One grid step = one option set (one batch element).

    tab_ref: (1, Kp, 8) f32  per-im2col-row metadata; row k = tap*C + c for the
             9*C conv taps, plus one trailing bias row.  Columns are
             [dh, dw, opt_i, opt_j, mask, depth, const, unused].
    w_ref  : (Fp, Kp) bf16   conv weights (tap-major columns) with the bias
             folded in as the last column; F zero-padded to Fp (mult of 128).
    o_ref  : (1, Fp, HW) f32 channel-major output block (lanes = H*W, dense).
    """
    _, Fp, HW = o_ref.shape

    tab = tab_ref[0]                       # (Kp, 8) f32
    dh, dw = tab[:, 0:1], tab[:, 1:2]      # (Kp, 1) each
    oi, oj = tab[:, 2:3], tab[:, 3:4]
    mk, dp = tab[:, 4:5], tab[:, 5:6]
    cst = tab[:, 6:7]                      # 1.0 only on the bias row

    # Pixel index along the lane axis (fully dense: HW lanes).
    p = jax.lax.broadcasted_iota(jnp.int32, (1, HW), 1)
    if (W & (W - 1)) == 0:                 # power-of-two width: shift/mask on VPU
        y = jnp.right_shift(p, W.bit_length() - 1)
        x = jnp.bitwise_and(p, W - 1)
    else:
        y = p // W
        x = p - y * W
    yf = y.astype(jnp.float32)
    xf = x.astype(jnp.float32)

    # Source image coordinates per (im2col row, pixel); padding = 1.
    # All coordinates are small integers, so f32 compares are exact.
    r = yf + (dh - 1.0)                    # (Kp, HW)
    s = xf + (dw - 1.0)
    valid = (r >= 0.0) & (r < H) & (s >= 0.0) & (s < W)
    hit = valid & (r == oi) & (s == oj)

    # encode(): plane = mask * (depth + onehot(i, j)); zero outside the image.
    # `cst` injects the constant-1 bias row so the bias rides the MXU for free.
    patch = jnp.where(valid, mk * dp, 0.0) + jnp.where(hit, mk, 0.0) + cst

    acc = jnp.dot(w_ref[...], patch.astype(jnp.bfloat16),
                  preferred_element_type=jnp.float32)        # (Fp, HW) f32
    o_ref[0] = jnp.maximum(acc, 0.0)       # ReLU; lane-dense unmasked stores


# ----------------------- one-time (hoisted) weight prep -------------------- #
def prepare_conv_params(w_oihw, bias):
    """OIHW conv weights + bias -> (Fp, 9*C+1) bf16 matrix (bias folded in)."""
    F, C, KH, KW = w_oihw.shape
    assert (KH, KW) == (3, 3)
    Fp = max(128, ((F + 127) // 128) * 128)
    w_hwio = jnp.transpose(w_oihw, (2, 3, 1, 0)).reshape(KH * KW * C, F)
    w_aug = jnp.concatenate(
        [w_hwio, bias.astype(jnp.float32).reshape(1, F)], axis=0)     # (9C+1, F)
    w_aug = jnp.pad(w_aug, ((0, 0), (0, Fp - F)))
    return jnp.transpose(w_aug).astype(jnp.bfloat16)                  # (Fp, Kp)


def init_params(key, num_inputs, n_features):
    # Deterministic init mimicking torch.nn.Conv2d defaults (uniform +-1/sqrt(fan_in)).
    fan_in = num_inputs * 3 * 3
    bound = 1.0 / np.sqrt(fan_in)
    kw, kb = jax.random.split(key)
    w_oihw = jax.random.uniform(kw, (n_features, num_inputs, 3, 3),
                                jnp.float32, minval=-bound, maxval=bound)
    bias = jax.random.uniform(kb, (n_features,), jnp.float32,
                              minval=-bound, maxval=bound)
    return w_oihw, bias


# -------------------- options -> tiny device array (host) ------------------ #
def options_to_array(options_batch, num_inputs):
    """List of option lists -> (B, C, 4) f32 array of [i, j, mask, depth]."""
    B = len(options_batch)
    arr = np.zeros((B, num_inputs, 4), np.float32)
    arr[:, :, 0:2] = -1.0                      # (i, j) sentinel for "absent"
    for b, options in enumerate(options_batch):
        assert len(options) == num_inputs
        for c, opt in enumerate(options):
            if opt is not None:
                (i, j), depth = opt
                arr[b, c] = (float(i), float(j), 1.0, float(depth))
    return jnp.asarray(arr)


# ------------------------------ forward pass ------------------------------- #
def build_forward(image_shape, num_inputs, n_features):
    """Returns a jitted forward: (opt_arr (B,C,4), w_matT (Fp,Kp)) -> (B,F,H,W)."""
    H, W = image_shape
    C = num_inputs
    HW = H * W
    K = 9 * C
    Kp = K + 1                                              # + bias row

    taps = np.arange(9)
    dhdw_const = jnp.asarray(
        np.stack([np.repeat(taps // 3, C), np.repeat(taps % 3, C)], axis=-1),
        dtype=jnp.float32)                                  # (K, 2), row k = tap*C+c
    bias_row = jnp.asarray([0., 0., -1., -1., 0., 0., 1., 0.], dtype=jnp.float32)

    @jax.jit
    def forward(opt_arr, w_matT):
        B = opt_arr.shape[0]
        Fp, kp = w_matT.shape
        assert kp == Kp and opt_arr.shape[1:] == (C, 4)

        # Expand per-channel options -> per-im2col-row table, all on device.
        rows = jnp.concatenate(
            [jnp.broadcast_to(dhdw_const[None], (B, K, 2)),
             jnp.tile(opt_arr, (1, 9, 1)),                  # row k = tap*C + c
             jnp.zeros((B, K, 2), jnp.float32)],
            axis=-1)                                        # (B, K, 8)
        tab = jnp.concatenate(
            [rows, jnp.broadcast_to(bias_row[None, None], (B, 1, 8))],
            axis=1)                                         # (B, Kp, 8)

        out = pl.pallas_call(
            functools.partial(_fused_encode_conv_kernel, H=H, W=W),
            out_shape=jax.ShapeDtypeStruct((B, Fp, HW), jnp.float32),
            grid=(B,),                                      # batch only; no row split
            in_specs=[
                pl.BlockSpec((1, Kp, 8), lambda b: (b, 0, 0)),   # per-batch table
                pl.BlockSpec((Fp, Kp), lambda b: (0, 0)),        # resident weights
            ],
            out_specs=pl.BlockSpec((1, Fp, HW), lambda b: (b, 0, 0)),
            compiler_params=pltpu.CompilerParams(
                dimension_semantics=("arbitrary",)),
        )(tab, w_matT)

        # Channel-major output: sublane slice + free reshape, no transpose.
        return out[:, :n_features, :].reshape(B, n_features, H, W)

    return forward


def encoder_forward(options, w_matT, forward_fn, num_inputs):
    """EncoderModel.forward semantics: one option list -> [1, F, H, W] (f32)."""
    return forward_fn(options_to_array([options], num_inputs), w_matT)


# --------------------------------- reference -------------------------------- #
def reference_forward(options_batch, image_shape, w_oihw, bias):
    def encode_ref(opt):
        res = jnp.zeros(image_shape, jnp.float32)
        if opt is not None:
            (i, j), depth = opt
            res = res.at[i, j].set(1.0) + jnp.float32(depth)
        return res

    x = jnp.stack([jnp.stack([encode_ref(o) for o in opts], 0)
                   for opts in options_batch], 0)                    # (B, C, H, W)
    # Mirror the kernel's bf16 MXU inputs (weights, bias, patch); f32 accumulation.
    x_bf = x.astype(jnp.bfloat16).astype(jnp.float32)
    w_bf = w_oihw.astype(jnp.bfloat16).astype(jnp.float32)
    b_bf = bias.astype(jnp.bfloat16).astype(jnp.float32)
    y = jax.lax.conv_general_dilated(
        x_bf, w_bf, window_strides=(1, 1), padding="SAME",
        dimension_numbers=("NCHW", "OIHW", "NCHW"))
    return jnp.maximum(y + b_bf[None, :, None, None], 0.0)


# ---------------------------------- main ----------------------------------- #
if __name__ == "__main__":
    image_shape = (16, 16)      # (im_x, im_y)
    num_inputs = 4
    n_features = 32

    key = jax.random.PRNGKey(0)
    w_oihw, bias = init_params(key, num_inputs, n_features)
    w_matT = prepare_conv_params(w_oihw, bias)        # one-time weight prep

    forward_fn = build_forward(image_shape, num_inputs, n_features)

    # Deterministic options; one None to exercise the "absent option" branch.
    options = [((1, 3), 0.5), ((7, 2), 1.25), None, ((15, 15), -0.75)]
    options_batch = [
        options,
        [None, ((0, 0), 2.0), ((8, 11), -0.5), ((3, 9), 0.125)],
    ]

    # Module-semantics forward: single option set -> [1, F, H, W].
    out1 = jax.block_until_ready(
        encoder_forward(options, w_matT, forward_fn, num_inputs))
    assert out1.shape == (1, n_features, image_shape[0], image_shape[1])

    # Batched forward: amortizes launch/step overhead across option sets.
    out2 = jax.block_until_ready(
        forward_fn(options_to_array(options_batch, num_inputs), w_matT))
    assert out2.shape == (2, n_features, image_shape[0], image_shape[1])

    ref = reference_forward(options_batch, image_shape, w_oihw, bias)
    np.testing.assert_allclose(np.asarray(out1), np.asarray(ref[:1]),
                               rtol=2e-3, atol=2e-3)
    np.testing.assert_allclose(np.asarray(out2), np.asarray(ref),
                               rtol=2e-3, atol=2e-3)
    print("KERNEL_OK")
</pallas_src>

<mosaic_0001>
module attributes {stable_mosaic.version = 11 : i64} {
  func.func @_fused_encode_conv_kernel(%arg0: i32, %arg1: memref<1x37x8xf32, #tpu.memory_space<vmem>>, %arg2: memref<128x37xbf16, #tpu.memory_space<vmem>>, %arg3: memref<1x128x256xf32, #tpu.memory_space<vmem>>) attributes {dimension_semantics = [#tpu.dimension_semantics<arbitrary>], iteration_bounds = array<i64: 1>, scalar_prefetch = 0 : i64, scratch_operands = 0 : i64, tpu.core_type = #tpu.core_type<tc>, window_params = [{transform_indices = @transform_0, window_bounds = array<i64: 1, 37, 8>}, {pipeline_mode = #tpu.pipeline_mode<synchronous>, transform_indices = @transform_1, window_bounds = array<i64: 128, 37>}, {transform_indices = @transform_2, window_bounds = array<i64: 1, 128, 256>}]} {
    %c0 = arith.constant 0 : index
    %c0_0 = arith.constant 0 : index
    %c0_1 = arith.constant 0 : index
    %0 = vector.load %arg1[%c0, %c0_0, %c0_1] : memref<1x37x8xf32, #tpu.memory_space<vmem>>, vector<1x37x8xf32>
    %1 = vector.shape_cast %0 : vector<1x37x8xf32> to vector<37x8xf32>
    %2 = vector.extract_strided_slice %1 {offsets = [0, 0], sizes = [37, 1], strides = [1, 1]} : vector<37x8xf32> to vector<37x1xf32>
    %3 = vector.extract_strided_slice %1 {offsets = [0, 1], sizes = [37, 1], strides = [1, 1]} : vector<37x8xf32> to vector<37x1xf32>
    %4 = vector.extract_strided_slice %1 {offsets = [0, 2], sizes = [37, 1], strides = [1, 1]} : vector<37x8xf32> to vector<37x1xf32>
    %5 = vector.extract_strided_slice %1 {offsets = [0, 3], sizes = [37, 1], strides = [1, 1]} : vector<37x8xf32> to vector<37x1xf32>
    %6 = vector.extract_strided_slice %1 {offsets = [0, 4], sizes = [37, 1], strides = [1, 1]} : vector<37x8xf32> to vector<37x1xf32>
    %7 = vector.extract_strided_slice %1 {offsets = [0, 5], sizes = [37, 1], strides = [1, 1]} : vector<37x8xf32> to vector<37x1xf32>
    %8 = vector.extract_strided_slice %1 {offsets = [0, 6], sizes = [37, 1], strides = [1, 1]} : vector<37x8xf32> to vector<37x1xf32>
    %9 = tpu.iota {dimensions = array<i32: 1>} : vector<1x256xi32>
    %c4_i32 = arith.constant 4 : i32
    %10 = vector.broadcast %c4_i32 : i32 to vector<1x256xi32>
    %11 = arith.shrsi %9, %10 : vector<1x256xi32>
    %c15_i32 = arith.constant 15 : i32
    %12 = vector.broadcast %c15_i32 : i32 to vector<1x256xi32>
    %13 = arith.andi %9, %12 : vector<1x256xi32>
    %14 = arith.sitofp %11 : vector<1x256xi32> to vector<1x256xf32>
    %15 = arith.sitofp %13 : vector<1x256xi32> to vector<1x256xf32>
    %cst = arith.constant 1.000000e+00 : f32
    %16 = vector.broadcast %cst : f32 to vector<37x1xf32>
    %17 = arith.subf %2, %16 : vector<37x1xf32>
    %18 = vector.broadcast %14 : vector<1x256xf32> to vector<37x256xf32>
    %19 = vector.broadcast %17 : vector<37x1xf32> to vector<37x256xf32>
    %20 = arith.addf %18, %19 : vector<37x256xf32>
    %cst_2 = arith.constant 1.000000e+00 : f32
    %21 = vector.broadcast %cst_2 : f32 to vector<37x1xf32>
    %22 = arith.subf %3, %21 : vector<37x1xf32>
    %23 = vector.broadcast %15 : vector<1x256xf32> to vector<37x256xf32>
    %24 = vector.broadcast %22 : vector<37x1xf32> to vector<37x256xf32>
    %25 = arith.addf %23, %24 : vector<37x256xf32>
    %cst_3 = arith.constant 0.000000e+00 : f32
    %26 = vector.broadcast %cst_3 : f32 to vector<37x256xf32>
    %27 = arith.cmpf oge, %20, %26 : vector<37x256xf32>
    %cst_4 = arith.constant 1.600000e+01 : f32
    %28 = vector.broadcast %cst_4 : f32 to vector<37x256xf32>
    %29 = arith.cmpf olt, %20, %28 : vector<37x256xf32>
    %30 = arith.andi %27, %29 : vector<37x256xi1>
    %cst_5 = arith.constant 0.000000e+00 : f32
    %31 = vector.broadcast %cst_5 : f32 to vector<37x256xf32>
    %32 = arith.cmpf oge, %25, %31 : vector<37x256xf32>
    %33 = arith.andi %30, %32 : vector<37x256xi1>
    %cst_6 = arith.constant 1.600000e+01 : f32
    %34 = vector.broadcast %cst_6 : f32 to vector<37x256xf32>
    %35 = arith.cmpf olt, %25, %34 : vector<37x256xf32>
    %36 = arith.andi %33, %35 : vector<37x256xi1>
    %37 = vector.broadcast %4 : vector<37x1xf32> to vector<37x256xf32>
    %38 = arith.cmpf oeq, %20, %37 : vector<37x256xf32>
    %39 = arith.andi %36, %38 : vector<37x256xi1>
    %40 = vector.broadcast %5 : vector<37x1xf32> to vector<37x256xf32>
    %41 = arith.cmpf oeq, %25, %40 : vector<37x256xf32>
    %42 = arith.andi %39, %41 : vector<37x256xi1>
    %43 = arith.mulf %6, %7 : vector<37x1xf32>
    %cst_7 = arith.constant 0.000000e+00 : f32
    %44 = vector.shape_cast %43 : vector<37x1xf32> to vector<37x1xf32>
    %45 = vector.broadcast %44 : vector<37x1xf32> to vector<37x256xf32>
    %46 = vector.broadcast %cst_7 : f32 to vector<37x256xf32>
    %47 = arith.select %36, %45, %46 : vector<37x256xi1>, vector<37x256xf32>
    %cst_8 = arith.constant 0.000000e+00 : f32
    %48 = vector.shape_cast %6 : vector<37x1xf32> to vector<37x1xf32>
    %49 = vector.broadcast %48 : vector<37x1xf32> to vector<37x256xf32>
    %50 = vector.broadcast %cst_8 : f32 to vector<37x256xf32>
    %51 = arith.select %42, %49, %50 : vector<37x256xi1>, vector<37x256xf32>
    %52 = arith.addf %47, %51 : vector<37x256xf32>
    %53 = vector.broadcast %8 : vector<37x1xf32> to vector<37x256xf32>
    %54 = arith.addf %52, %53 : vector<37x256xf32>
    %c0_9 = arith.constant 0 : index
    %c0_10 = arith.constant 0 : index
    %55 = vector.load %arg2[%c0_9, %c0_10] : memref<128x37xbf16, #tpu.memory_space<vmem>>, vector<128x37xbf16>
    %56 = arith.truncf %54 : vector<37x256xf32> to vector<37x256xbf16>
    %cst_11 = arith.constant dense<0.000000e+00> : vector<128x256xf32>
    %57 = tpu.matmul %55, %56, %cst_11 {dimension_numbers = #tpu.dot_dimension_numbers<[1], [0], [0], [1], [0, 0, 1, 1], [], []>} : vector<128x37xbf16>, vector<37x256xbf16>, vector<128x256xf32> -> vector<128x256xf32>
    %cst_12 = arith.constant 0.000000e+00 : f32
    %58 = vector.broadcast %cst_12 : f32 to vector<128x256xf32>
    %59 = arith.maximumf %57, %58 : vector<128x256xf32>
    %c0_13 = arith.constant 0 : index
    %c0_14 = arith.constant 0 : index
    %c0_15 = arith.constant 0 : index
    %60 = vector.load %arg3[%c0_13, %c0_14, %c0_15] : memref<1x128x256xf32, #tpu.memory_space<vmem>>, vector<1x128x256xf32>
    %61 = vector.shape_cast %60 : vector<1x128x256xf32> to vector<128x256xf32>
    %62 = vector.shape_cast %59 : vector<128x256xf32> to vector<1x128x256xf32>
    tpu.vector_store %arg3[%c0_13, %c0_14, %c0_15], %62 {strides = array<i32>} : memref<1x128x256xf32, #tpu.memory_space<vmem>>, vector<1x128x256xf32>,
    return
  }
  func.func @transform_0(%arg0: i32) -> (i32, i32, i32) {
    %c0_i32 = arith.constant 0 : i32
    %c0_i32_0 = arith.constant 0 : i32
    %c0_i32_1 = arith.constant 0 : i32
    return %arg0, %c0_i32, %c0_i32_0 : i32, i32, i32
  }
  func.func @transform_1(%arg0: i32) -> (i32, i32) {
    %c0_i32 = arith.constant 0 : i32
    %c0_i32_0 = arith.constant 0 : i32
    %c0_i32_1 = arith.constant 0 : i32
    return %c0_i32, %c0_i32_0 : i32, i32
  }
  func.func @transform_2(%arg0: i32) -> (i32, i32, i32) {
    %c0_i32 = arith.constant 0 : i32
    %c0_i32_0 = arith.constant 0 : i32
    %c0_i32_1 = arith.constant 0 : i32
    return %arg0, %c0_i32, %c0_i32_0 : i32, i32, i32
  }
}

</mosaic_0001>

<llo_original>
// kernel: forward.1
$region0: #{forward.1}
  #allocation0 [shape = 'u32[]', space=smem, size = 0x4, offset = 0x4, fixed_abs, tag = 'smem constant byte address 0x4 - core index']
  #allocation1 [shape = 'u32[72,128]{1,0:T(1,128)}', space=vmem, size = 0x9000, scoped, tag = 'internal scratch']
  %s0 = inlined_call_operand.vmem [shape: f32[1,37,8], index: 0, kind: input, shape index: {}]
  %s1 = inlined_call_operand.vmem [shape: bf16[128,37], index: 1, kind: input, shape index: {}]
  %s2 = inlined_call_operand.vmem [shape: f32[1,128,256], index: 2, kind: output, shape index: {}]
  %s3 = sld [smem:[#allocation0]]
  $region18: #{forward.1} parent=0
    _
  %s5 = ssub.s32 1, %s3
  %s6 = scalar_select 0, %s5, %s3
  // Predicated region
  $region2: #{forward.1} parent=0 // pred_check
    _
  $region3: #{forward.1} parent=0 // pred_check_branch
    %8 = sbr.rel (0) target = $region5
  $region4: #{forward.1} parent=0 // pred_region
    _
  $region5: #{forward.1} parent=0 // pred_fallthru
    _
  // Predicated region
  $region6: #{forward.1} parent=0 // pred_check
    _
  $region7: #{forward.1} parent=0 // pred_check_branch
    %10 = sbr.rel (0) target = $region9
  $region8: #{forward.1} parent=0 // pred_region
    _
  $region9: #{forward.1} parent=0 // pred_fallthru
    _
  %v12 = vld [vmem:[%s0] sm:$0xff]
  %v13 = vld [vmem:[%s0 + $0x8] sm:$0xff]
  %v14 = vld [vmem:[%s0 + $0x10] sm:$0xff]
  %v15 = vld [vmem:[%s0 + $0x18] sm:$0xff]
  %v16 = vld [vmem:[%s0 + $0x20] sm:$0x1f]
  %v17 = vlaneseq
  %v18 = vand.u32 %v17, 127
  %v19 = vadd.s32 %v18, 128
  %v20 = vshra.s32 %v18, 4
  %v21 = vshra.s32 %v19, 4
  %v22 = vand.u32 %v18, 15
  %v23 = vand.u32 %v19, 15
  %v24 = vcvt.s32.f32 %v20
  %v25 = vcvt.s32.f32 %v21
  %v26 = vcvt.s32.f32 %v22
  %v27 = vcvt.s32.f32 %v23
  %v28 = vsub.f32 %v12, 1.0
  %v29 = vsub.f32 %v13, 1.0
  %v30 = vsub.f32 %v14, 1.0
  %v31 = vsub.f32 %v15, 1.0
  %v32 = vsub.f32 %v16, 1.0
  %34 = vset.pattern.permute.xlu0 0
  %35 = vperm.xlu0 %34, %v28
  %v36 = vpop.permute.xlu0 %35
  %39 = vset.pattern.permute.xlu0 0
  %40 = vperm.xlu0 %39, %v29
  %v41 = vpop.permute.xlu0 %40
  %44 = vset.pattern.permute.xlu0 0
  %45 = vperm.xlu0 %44, %v30
  %v46 = vpop.permute.xlu0 %45
  %49 = vset.pattern.permute.xlu0 0
  %50 = vperm.xlu0 %49, %v31
  %v51 = vpop.permute.xlu0 %50
  %54 = vset.pattern.permute.xlu0 0
  %55 = vperm.xlu0 %54, %v32
  %v56 = vpop.permute.xlu0 %55
  %v58 = vadd.f32 %v24, %v36
  %v59 = vadd.f32 %v25, %v36
  %v60 = vadd.f32 %v24, %v41
  %v61 = vadd.f32 %v25, %v41
  %v62 = vadd.f32 %v24, %v46
  %v63 = vadd.f32 %v25, %v46
  %v64 = vadd.f32 %v24, %v51
  %v65 = vadd.f32 %v25, %v51
  %v66 = vadd.f32 %v24, %v56
  %v67 = vadd.f32 %v25, %v56
  %68 = vset.pattern.permute.xlu0 1
  %69 = vperm.xlu0 %68, %v28
  %v70 = vpop.permute.xlu0 %69
  %72 = vset.pattern.permute.xlu0 1
  %73 = vperm.xlu0 %72, %v29
  %v74 = vpop.permute.xlu0 %73
  %76 = vset.pattern.permute.xlu0 1
  %77 = vperm.xlu0 %76, %v30
  %v78 = vpop.permute.xlu0 %77
  %80 = vset.pattern.permute.xlu0 1
  %81 = vperm.xlu0 %80, %v31
  %v82 = vpop.permute.xlu0 %81
  %84 = vset.pattern.permute.xlu0 1
  %85 = vperm.xlu0 %84, %v32
  %v86 = vpop.permute.xlu0 %85
  %v88 = vadd.f32 %v26, %v70
  %v89 = vadd.f32 %v27, %v70
  %v90 = vadd.f32 %v26, %v74
  %v91 = vadd.f32 %v27, %v74
  %v92 = vadd.f32 %v26, %v78
  %v93 = vadd.f32 %v27, %v78
  %v94 = vadd.f32 %v26, %v82
  %v95 = vadd.f32 %v27, %v82
  %v96 = vadd.f32 %v26, %v86
  %v97 = vadd.f32 %v27, %v86
  %vm98 = vcmp.ge.f32.partialorder %v58, 0.0
  %vm99 = vcmp.ge.f32.partialorder %v59, 0.0
  %vm100 = vcmp.ge.f32.partialorder %v60, 0.0
  %vm101 = vcmp.ge.f32.partialorder %v61, 0.0
  %vm102 = vcmp.ge.f32.partialorder %v62, 0.0
  %vm103 = vcmp.ge.f32.partialorder %v63, 0.0
  %vm104 = vcmp.ge.f32.partialorder %v64, 0.0
  %vm105 = vcmp.ge.f32.partialorder %v65, 0.0
  %vm106 = vcmp.ge.f32.partialorder %v66, 0.0
  %vm107 = vcmp.ge.f32.partialorder %v67, 0.0
  %vm108 = vcmp.lt.f32.partialorder %v58, 16.0
  %vm109 = vcmp.lt.f32.partialorder %v59, 16.0
  %vm110 = vcmp.lt.f32.partialorder %v60, 16.0
  %vm111 = vcmp.lt.f32.partialorder %v61, 16.0
  %vm112 = vcmp.lt.f32.partialorder %v62, 16.0
  %vm113 = vcmp.lt.f32.partialorder %v63, 16.0
  %vm114 = vcmp.lt.f32.partialorder %v64, 16.0
  %vm115 = vcmp.lt.f32.partialorder %v65, 16.0
  %vm116 = vcmp.lt.f32.partialorder %v66, 16.0
  %vm117 = vcmp.lt.f32.partialorder %v67, 16.0
  %vm118 = vmand %vm98, %vm108
  %vm119 = vmand %vm99, %vm109
  %vm120 = vmand %vm100, %vm110
  %vm121 = vmand %vm101, %vm111
  %vm122 = vmand %vm102, %vm112
  %vm123 = vmand %vm103, %vm113
  %vm124 = vmand %vm104, %vm114
  %vm125 = vmand %vm105, %vm115
  %vm126 = vmand %vm106, %vm116
  %vm127 = vmand %vm107, %vm117
  %vm128 = vcmp.ge.f32.partialorder %v88, 0.0
  %vm129 = vcmp.ge.f32.partialorder %v89, 0.0
  %vm130 = vcmp.ge.f32.partialorder %v90, 0.0
  %vm131 = vcmp.ge.f32.partialorder %v91, 0.0
  %vm132 = vcmp.ge.f32.partialorder %v92, 0.0
  %vm133 = vcmp.ge.f32.partialorder %v93, 0.0
  %vm134 = vcmp.ge.f32.partialorder %v94, 0.0
  %vm135 = vcmp.ge.f32.partialorder %v95, 0.0
  %vm136 = vcmp.ge.f32.partialorder %v96, 0.0
  %vm137 = vcmp.ge.f32.partialorder %v97, 0.0
  %vm138 = vmand %vm118, %vm128
  %vm139 = vmand %vm119, %vm129
  %vm140 = vmand %vm120, %vm130
  %vm141 = vmand %vm121, %vm131
  %vm142 = vmand %vm122, %vm132
  %vm143 = vmand %vm123, %vm133
  %vm144 = vmand %vm124, %vm134
  %vm145 = vmand %vm125, %vm135
  %vm146 = vmand %vm126, %vm136
  %vm147 = vmand %vm127, %vm137
  %vm148 = vcmp.lt.f32.partialorder %v88, 16.0
  %vm149 = vcmp.lt.f32.partialorder %v89, 16.0
  %vm150 = vcmp.lt.f32.partialorder %v90, 16.0
  %vm151 = vcmp.lt.f32.partialorder %v91, 16.0
  %vm152 = vcmp.lt.f32.partialorder %v92, 16.0
  %vm153 = vcmp.lt.f32.partialorder %v93, 16.0
  %vm154 = vcmp.lt.f32.partialorder %v94, 16.0
  %vm155 = vcmp.lt.f32.partialorder %v95, 16.0
  %vm156 = vcmp.lt.f32.partialorder %v96, 16.0
  %vm157 = vcmp.lt.f32.partialorder %v97, 16.0
  %vm158 = vmand %vm138, %vm148
  %vm159 = vmand %vm139, %vm149
  %vm160 = vmand %vm140, %vm150
  %vm161 = vmand %vm141, %vm151
  %vm162 = vmand %vm142, %vm152
  %vm163 = vmand %vm143, %vm153
  %vm164 = vmand %vm144, %vm154
  %vm165 = vmand %vm145, %vm155
  %vm166 = vmand %vm146, %vm156
  %vm167 = vmand %vm147, %vm157
  %169 = vset.pattern.permute.xlu0 2
  %170 = vperm.xlu0 %169, %v12
  %v171 = vpop.permute.xlu0 %170
  %174 = vset.pattern.permute.xlu0 2
  %175 = vperm.xlu0 %174, %v13
  %v176 = vpop.permute.xlu0 %175
  %179 = vset.pattern.permute.xlu0 2
  %180 = vperm.xlu0 %179, %v14
  %v181 = vpop.permute.xlu0 %180
  %184 = vset.pattern.permute.xlu0 2
  %185 = vperm.xlu0 %184, %v15
  %v186 = vpop.permute.xlu0 %185
  %189 = vset.pattern.permute.xlu0 2
  %190 = vperm.xlu0 %189, %v16
  %v191 = vpop.permute.xlu0 %190
  %vm193 = vcmp.eq.f32.partialorder %v58, %v171
  %vm194 = vcmp.eq.f32.partialorder %v59, %v171
  %vm195 = vcmp.eq.f32.partialorder %v60, %v176
  %vm196 = vcmp.eq.f32.partialorder %v61, %v176
  %vm197 = vcmp.eq.f32.partialorder %v62, %v181
  %vm198 = vcmp.eq.f32.partialorder %v63, %v181
  %vm199 = vcmp.eq.f32.partialorder %v64, %v186
  %vm200 = vcmp.eq.f32.partialorder %v65, %v186
  %vm201 = vcmp.eq.f32.partialorder %v66, %v191
  %vm202 = vcmp.eq.f32.partialorder %v67, %v191
  %vm203 = vmand %vm158, %vm193
  %vm204 = vmand %vm159, %vm194
  %vm205 = vmand %vm160, %vm195
  %vm206 = vmand %vm161, %vm196
  %vm207 = vmand %vm162, %vm197
  %vm208 = vmand %vm163, %vm198
  %vm209 = vmand %vm164, %vm199
  %vm210 = vmand %vm165, %vm200
  %vm211 = vmand %vm166, %vm201
  %vm212 = vmand %vm167, %vm202
  %213 = vset.pattern.permute.xlu0 3
  %214 = vperm.xlu0 %213, %v12
  %v215 = vpop.permute.xlu0 %214
  %217 = vset.pattern.permute.xlu0 3
  %218 = vperm.xlu0 %217, %v13
  %v219 = vpop.permute.xlu0 %218
  %221 = vset.pattern.permute.xlu0 3
  %222 = vperm.xlu0 %221, %v14
  %v223 = vpop.permute.xlu0 %222
  %225 = vset.pattern.permute.xlu0 3
  %226 = vperm.xlu0 %225, %v15
  %v227 = vpop.permute.xlu0 %226
  %229 = vset.pattern.permute.xlu0 3
  %230 = vperm.xlu0 %229, %v16
  %v231 = vpop.permute.xlu0 %230
  %vm233 = vcmp.eq.f32.partialorder %v88, %v215
  %vm234 = vcmp.eq.f32.partialorder %v89, %v215
  %vm235 = vcmp.eq.f32.partialorder %v90, %v219
  %vm236 = vcmp.eq.f32.partialorder %v91, %v219
  %vm237 = vcmp.eq.f32.partialorder %v92, %v223
  %vm238 = vcmp.eq.f32.partialorder %v93, %v223
  %vm239 = vcmp.eq.f32.partialorder %v94, %v227
  %vm240 = vcmp.eq.f32.partialorder %v95, %v227
  %vm241 = vcmp.eq.f32.partialorder %v96, %v231
  %vm242 = vcmp.eq.f32.partialorder %v97, %v231
  %vm243 = vmand %vm203, %vm233
  %vm244 = vmand %vm204, %vm234
  %vm245 = vmand %vm205, %vm235
  %vm246 = vmand %vm206, %vm236
  %vm247 = vmand %vm207, %vm237
  %vm248 = vmand %vm208, %vm238
  %vm249 = vmand %vm209, %vm239
  %vm250 = vmand %vm210, %vm240
  %vm251 = vmand %vm211, %vm241
  %vm252 = vmand %vm212, %vm242
  %253 = vrot.lane.b32.xlu0 %v12, 127
  %v254 = vpop.permute.xlu0 %253
  %255 = vrot.lane.b32.xlu0 %v13, 127
  %v256 = vpop.permute.xlu0 %255
  %257 = vrot.lane.b32.xlu0 %v14, 127
  %v258 = vpop.permute.xlu0 %257
  %259 = vrot.lane.b32.xlu0 %v15, 127
  %v260 = vpop.permute.xlu0 %259
  %261 = vrot.lane.b32.xlu0 %v16, 127
  %v262 = vpop.permute.xlu0 %261
  %v268 = vmul.f32 %v12, %v254
  %v269 = vmul.f32 %v13, %v256
  %v270 = vmul.f32 %v14, %v258
  %v271 = vmul.f32 %v15, %v260
  %v272 = vmul.f32 %v16, %v262
  %274 = vset.pattern.permute.xlu0 4
  %275 = vperm.xlu0 %274, %v268
  %v276 = vpop.permute.xlu0 %275
  %279 = vset.pattern.permute.xlu0 4
  %280 = vperm.xlu0 %279, %v269
  %v281 = vpop.permute.xlu0 %280
  %284 = vset.pattern.permute.xlu0 4
  %285 = vperm.xlu0 %284, %v270
  %v286 = vpop.permute.xlu0 %285
  %289 = vset.pattern.permute.xlu0 4
  %290 = vperm.xlu0 %289, %v271
  %v291 = vpop.permute.xlu0 %290
  %294 = vset.pattern.permute.xlu0 4
  %295 = vperm.xlu0 %294, %v272
  %v296 = vpop.permute.xlu0 %295
  %v298 = vsel %vm158, %v276, 0.0
  %v299 = vsel %vm159, %v276, 0.0
  %v300 = vsel %vm160, %v281, 0.0
  %v301 = vsel %vm161, %v281, 0.0
  %v302 = vsel %vm162, %v286, 0.0
  %v303 = vsel %vm163, %v286, 0.0
  %v304 = vsel %vm164, %v291, 0.0
  %v305 = vsel %vm165, %v291, 0.0
  %v306 = vsel %vm166, %v296, 0.0
  %v307 = vsel %vm167, %v296, 0.0
  %308 = vset.pattern.permute.xlu0 4
  %309 = vperm.xlu0 %308, %v12
  %v310 = vpop.permute.xlu0 %309
  %312 = vset.pattern.permute.xlu0 4
  %313 = vperm.xlu0 %312, %v13
  %v314 = vpop.permute.xlu0 %313
  %316 = vset.pattern.permute.xlu0 4
  %317 = vperm.xlu0 %316, %v14
  %v318 = vpop.permute.xlu0 %317
  %320 = vset.pattern.permute.xlu0 4
  %321 = vperm.xlu0 %320, %v15
  %v322 = vpop.permute.xlu0 %321
  %324 = vset.pattern.permute.xlu0 4
  %325 = vperm.xlu0 %324, %v16
  %v326 = vpop.permute.xlu0 %325
  %v328 = vsel %vm243, %v310, 0.0
  %v329 = vsel %vm244, %v310, 0.0
  %v330 = vsel %vm245, %v314, 0.0
  %v331 = vsel %vm246, %v314, 0.0
  %v332 = vsel %vm247, %v318, 0.0
  %v333 = vsel %vm248, %v318, 0.0
  %v334 = vsel %vm249, %v322, 0.0
  %v335 = vsel %vm250, %v322, 0.0
  %v336 = vsel %vm251, %v326, 0.0
  %v337 = vsel %vm252, %v326, 0.0
  %v338 = vadd.f32 %v298, %v328
  %v339 = vadd.f32 %v299, %v329
  %v340 = vadd.f32 %v300, %v330
  %v341 = vadd.f32 %v301, %v331
  %v342 = vadd.f32 %v302, %v332
  %v343 = vadd.f32 %v303, %v333
  %v344 = vadd.f32 %v304, %v334
  %v345 = vadd.f32 %v305, %v335
  %v346 = vadd.f32 %v306, %v336
  %v347 = vadd.f32 %v307, %v337
  %348 = vset.pattern.permute.xlu0 6
  %349 = vperm.xlu0 %348, %v12
  %v350 = vpop.permute.xlu0 %349
  %352 = vset.pattern.permute.xlu0 6
  %353 = vperm.xlu0 %352, %v13
  %v354 = vpop.permute.xlu0 %353
  %356 = vset.pattern.permute.xlu0 6
  %357 = vperm.xlu0 %356, %v14
  %v358 = vpop.permute.xlu0 %357
  %360 = vset.pattern.permute.xlu0 6
  %361 = vperm.xlu0 %360, %v15
  %v362 = vpop.permute.xlu0 %361
  %364 = vset.pattern.permute.xlu0 6
  %365 = vperm.xlu0 %364, %v16
  %v366 = vpop.permute.xlu0 %365
  %v368 = vadd.f32 %v338, %v350
  %v369 = vadd.f32 %v339, %v350
  %v370 = vadd.f32 %v340, %v354
  %v371 = vadd.f32 %v341, %v354
  %v372 = vadd.f32 %v342, %v358
  %v373 = vadd.f32 %v343, %v358
  %v374 = vadd.f32 %v344, %v362
  %v375 = vadd.f32 %v345, %v362
  %v376 = vadd.f32 %v346, %v366
  %v377 = vadd.f32 %v347, %v366
  %v378 = vld [vmem:[%s1] sm:$0xf]
  %v379 = vld [vmem:[%s1 + $0x4] sm:$0xf]
  %v380 = vld [vmem:[%s1 + $0x8] sm:$0xf]
  %v381 = vld [vmem:[%s1 + $0xc] sm:$0xf]
  %v382 = vld [vmem:[%s1 + $0x10] sm:$0xf]
  %v383 = vld [vmem:[%s1 + $0x14] sm:$0xf]
  %v384 = vld [vmem:[%s1 + $0x18] sm:$0xf]
  %v385 = vld [vmem:[%s1 + $0x1c] sm:$0xf]
  %v386 = vld [vmem:[%s1 + $0x20] sm:$0xf]
  %v387 = vld [vmem:[%s1 + $0x24] sm:$0xf]
  %v388 = vld [vmem:[%s1 + $0x28] sm:$0xf]
  %v389 = vld [vmem:[%s1 + $0x2c] sm:$0xf]
  %v390 = vld [vmem:[%s1 + $0x30] sm:$0xf]
  %v391 = vld [vmem:[%s1 + $0x34] sm:$0xf]
  %v392 = vld [vmem:[%s1 + $0x38] sm:$0xf]
  %v393 = vld [vmem:[%s1 + $0x3c] sm:$0xf]
  %v394 = vpack.c.bf16 %v370, %v368
  %v395 = vpack.c.bf16 %v371, %v369
  %v396 = vpack.c.bf16 %v374, %v372
  %v397 = vpack.c.bf16 %v375, %v373
  %v398 = vpack.c.bf16 %v376, %v376
  %v399 = vpack.c.bf16 %v377, %v377
  %v416 = vunpack.c.l.b16 %v378
  %v417 = vunpack.c.l.b16 %v379
  %v418 = vunpack.c.l.b16 %v380
  %v419 = vunpack.c.l.b16 %v381
  %v420 = vunpack.c.l.b16 %v382
  %v421 = vunpack.c.l.b16 %v383
  %v422 = vunpack.c.l.b16 %v384
  %v423 = vunpack.c.l.b16 %v385
  %v424 = vunpack.c.l.b16 %v386
  %v425 = vunpack.c.l.b16 %v387
  %v426 = vunpack.c.l.b16 %v388
  %v427 = vunpack.c.l.b16 %v389
  %v428 = vunpack.c.l.b16 %v390
  %v429 = vunpack.c.l.b16 %v391
  %v430 = vunpack.c.l.b16 %v392
  %v431 = vunpack.c.l.b16 %v393
  %v432 = vpack.c.b16 %v417, %v416
  %v433 = vpack.c.b16 %v419, %v418
  %v434 = vpack.c.b16 %v421, %v420
  %v435 = vpack.c.b16 %v423, %v422
  %v436 = vpack.c.b16 %v425, %v424
  %v437 = vpack.c.b16 %v427, %v426
  %v438 = vpack.c.b16 %v429, %v428
  %v439 = vpack.c.b16 %v431, %v430
  %vm440 = vcmask 302080
  %v442 = vsel %vm440, %v432, 0
  %v445 = vsel %vm440, %v433, 0
  %v448 = vsel %vm440, %v434, 0
  %v451 = vsel %vm440, %v435, 0
  %v454 = vsel %vm440, %v436, 0
  %v457 = vsel %vm440, %v437, 0
  %v460 = vsel %vm440, %v438, 0
  %v463 = vsel %vm440, %v439, 0
  %vm465 = vcmask 1041408
  %vm466 = vcmask 1042432
  %v467 = vsel %vm465, 4294967295, 65535
  %v468 = vsel %vm466, %v467, 0
  %v470 = vand.u32 %v398, %v468
  %v473 = vand.u32 %v399, %v468
  %475 = vmatpush.bf16.msra.mxu0 0
  %476 = vmatpush.bf16.msra.mxu0 0
  %477 = vmatpush.bf16.msra.mxu0 0
  %478 = vmatpush.bf16.msra.mxu0 0
  %479 = vmatpush.bf16.msra.mxu0 0
  %480 = vmatpush.bf16.msra.mxu0 %v470
  %481 = vmatpush.bf16.msra.mxu0 %v396
  %482 = vmatpush.bf16.msra.mxu0 %v394
  %483 = vmatmul.bf16.gmra.mxu0 %v442
  %v484 = vpop.f32.mrf.mxu0
  %v485 = vadd.f32 0.0, %v484
  %v486 = vpop.f32.mrf.mxu0
  %v487 = vadd.f32 0.0, %v486
  %488 = vmatmul.bf16.gmra.mxu0 %v445
  %v489 = vpop.f32.mrf.mxu0
  %v490 = vadd.f32 0.0, %v489
  %v491 = vpop.f32.mrf.mxu0
  %v492 = vadd.f32 0.0, %v491
  %493 = vmatmul.bf16.gmra.mxu0 %v448
  %v494 = vpop.f32.mrf.mxu0
  %v495 = vadd.f32 0.0, %v494
  %v496 = vpop.f32.mrf.mxu0
  %v497 = vadd.f32 0.0, %v496
  %498 = vmatmul.bf16.gmra.mxu0 %v451
  %v499 = vpop.f32.mrf.mxu0
  %v500 = vadd.f32 0.0, %v499
  %v501 = vpop.f32.mrf.mxu0
  %v502 = vadd.f32 0.0, %v501
  %503 = vmatmul.bf16.gmra.mxu0 %v454
  %v504 = vpop.f32.mrf.mxu0
  %v505 = vadd.f32 0.0, %v504
  %v506 = vpop.f32.mrf.mxu0
  %v507 = vadd.f32 0.0, %v506
  %508 = vmatmul.bf16.gmra.mxu0 %v457
  %v509 = vpop.f32.mrf.mxu0
  %v510 = vadd.f32 0.0, %v509
  %v511 = vpop.f32.mrf.mxu0
  %v512 = vadd.f32 0.0, %v511
  %513 = vmatmul.bf16.gmra.mxu0 %v460
  %v514 = vpop.f32.mrf.mxu0
  %v515 = vadd.f32 0.0, %v514
  %v516 = vpop.f32.mrf.mxu0
  %v517 = vadd.f32 0.0, %v516
  %518 = vmatmul.bf16.gmra.mxu0 %v463
  %v519 = vpop.f32.mrf.mxu0
  %v520 = vadd.f32 0.0, %v519
  %v521 = vpop.f32.mrf.mxu0
  %v522 = vadd.f32 0.0, %v521
  %523 = vdwg.mxu0
  %524 = vmatpush.bf16.msra.mxu0 0
  %525 = vmatpush.bf16.msra.mxu0 0
  %526 = vmatpush.bf16.msra.mxu0 0
  %527 = vmatpush.bf16.msra.mxu0 0
  %528 = vmatpush.bf16.msra.mxu0 0
  %529 = vmatpush.bf16.msra.mxu0 %v473
  %530 = vmatpush.bf16.msra.mxu0 %v397
  %531 = vmatpush.bf16.msra.mxu0 %v395
  %532 = vmatmul.bf16.gmra.mxu0 %v442
  %v533 = vpop.f32.mrf.mxu0
  %v534 = vadd.f32 0.0, %v533
  %v535 = vpop.f32.mrf.mxu0
  %v536 = vadd.f32 0.0, %v535
  %537 = vmatmul.bf16.gmra.mxu0 %v445
  %v538 = vpop.f32.mrf.mxu0
  %v539 = vadd.f32 0.0, %v538
  %v540 = vpop.f32.mrf.mxu0
  %v541 = vadd.f32 0.0, %v540
  %542 = vmatmul.bf16.gmra.mxu0 %v448
  %v543 = vpop.f32.mrf.mxu0
  %v544 = vadd.f32 0.0, %v543
  %v545 = vpop.f32.mrf.mxu0
  %v546 = vadd.f32 0.0, %v545
  %547 = vmatmul.bf16.gmra.mxu0 %v451
  %v548 = vpop.f32.mrf.mxu0
  %v549 = vadd.f32 0.0, %v548
  %v550 = vpop.f32.mrf.mxu0
  %v551 = vadd.f32 0.0, %v550
  %552 = vmatmul.bf16.gmra.mxu0 %v454
  %v553 = vpop.f32.mrf.mxu0
  %v554 = vadd.f32 0.0, %v553
  %v555 = vpop.f32.mrf.mxu0
  %v556 = vadd.f32 0.0, %v555
  %557 = vmatmul.bf16.gmra.mxu0 %v457
  %v558 = vpop.f32.mrf.mxu0
  %v559 = vadd.f32 0.0, %v558
  %v560 = vpop.f32.mrf.mxu0
  %v561 = vadd.f32 0.0, %v560
  %562 = vmatmul.bf16.gmra.mxu0 %v460
  %v563 = vpop.f32.mrf.mxu0
  %v564 = vadd.f32 0.0, %v563
  %v565 = vpop.f32.mrf.mxu0
  %v566 = vadd.f32 0.0, %v565
  %567 = vmatmul.bf16.gmra.mxu0 %v463
  %v568 = vpop.f32.mrf.mxu0
  %v569 = vadd.f32 0.0, %v568
  %v570 = vpop.f32.mrf.mxu0
  %v571 = vadd.f32 0.0, %v570
  %572 = vdwg.mxu0
  %v573 = vmax.f32 %v485, 0.0
  %v574 = vmax.f32 %v534, 0.0
  %v575 = vmax.f32 %v487, 0.0
  %v576 = vmax.f32 %v536, 0.0
  %v577 = vmax.f32 %v490, 0.0
  %v578 = vmax.f32 %v539, 0.0
  %v579 = vmax.f32 %v492, 0.0
  %v580 = vmax.f32 %v541, 0.0
  %v581 = vmax.f32 %v495, 0.0
  %v582 = vmax.f32 %v544, 0.0
  %v583 = vmax.f32 %v497, 0.0
  %v584 = vmax.f32 %v546, 0.0
  %v585 = vmax.f32 %v500, 0.0
  %v586 = vmax.f32 %v549, 0.0
  %v587 = vmax.f32 %v502, 0.0
  %v588 = vmax.f32 %v551, 0.0
  %v589 = vmax.f32 %v505, 0.0
  %v590 = vmax.f32 %v554, 0.0
  %v591 = vmax.f32 %v507, 0.0
  %v592 = vmax.f32 %v556, 0.0
  %v593 = vmax.f32 %v510, 0.0
  %v594 = vmax.f32 %v559, 0.0
  %v595 = vmax.f32 %v512, 0.0
  %v596 = vmax.f32 %v561, 0.0
  %v597 = vmax.f32 %v515, 0.0
  %v598 = vmax.f32 %v564, 0.0
  %v599 = vmax.f32 %v517, 0.0
  %v600 = vmax.f32 %v566, 0.0
  %v601 = vmax.f32 %v520, 0.0
  %v602 = vmax.f32 %v569, 0.0
  %v603 = vmax.f32 %v522, 0.0
  %v604 = vmax.f32 %v571, 0.0
  %605 = vst [vmem:[%s2] sm:$0xff] %v573
  %606 = vst [vmem:[%s2 + $0x8] sm:$0xff] %v574
  %607 = vst [vmem:[%s2 + $0x10] sm:$0xff] %v575
  %608 = vst [vmem:[%s2 + $0x18] sm:$0xff] %v576
  %609 = vst [vmem:[%s2 + $0x20] sm:$0xff] %v577
  %610 = vst [vmem:[%s2 + $0x28] sm:$0xff] %v578
  %611 = vst [vmem:[%s2 + $0x30] sm:$0xff] %v579
  %612 = vst [vmem:[%s2 + $0x38] sm:$0xff] %v580
  %613 = vst [vmem:[%s2 + $0x40] sm:$0xff] %v581
  %614 = vst [vmem:[%s2 + $0x48] sm:$0xff] %v582
  %615 = vst [vmem:[%s2 + $0x50] sm:$0xff] %v583
  %616 = vst [vmem:[%s2 + $0x58] sm:$0xff] %v584
  %617 = vst [vmem:[%s2 + $0x60] sm:$0xff] %v585
  %618 = vst [vmem:[%s2 + $0x68] sm:$0xff] %v586
  %619 = vst [vmem:[%s2 + $0x70] sm:$0xff] %v587
  %620 = vst [vmem:[%s2 + $0x78] sm:$0xff] %v588
  %621 = vst [vmem:[%s2 + $0x80] sm:$0xff] %v589
  %622 = vst [vmem:[%s2 + $0x88] sm:$0xff] %v590
  %623 = vst [vmem:[%s2 + $0x90] sm:$0xff] %v591
  %624 = vst [vmem:[%s2 + $0x98] sm:$0xff] %v592
  %625 = vst [vmem:[%s2 + $0xa0] sm:$0xff] %v593
  %626 = vst [vmem:[%s2 + $0xa8] sm:$0xff] %v594
  %627 = vst [vmem:[%s2 + $0xb0] sm:$0xff] %v595
  %628 = vst [vmem:[%s2 + $0xb8] sm:$0xff] %v596
  %629 = vst [vmem:[%s2 + $0xc0] sm:$0xff] %v597
  %630 = vst [vmem:[%s2 + $0xc8] sm:$0xff] %v598
  %631 = vst [vmem:[%s2 + $0xd0] sm:$0xff] %v599
  %632 = vst [vmem:[%s2 + $0xd8] sm:$0xff] %v600
  %633 = vst [vmem:[%s2 + $0xe0] sm:$0xff] %v601
  %634 = vst [vmem:[%s2 + $0xe8] sm:$0xff] %v602
  %635 = vst [vmem:[%s2 + $0xf0] sm:$0xff] %v603
  %636 = vst [vmem:[%s2 + $0xf8] sm:$0xff] %v604
  // Predicated region
  $region10: #{forward.1} parent=0 // pred_check
    _
  $region11: #{forward.1} parent=0 // pred_check_branch
    %638 = sbr.rel (0) target = $region13
  $region12: #{forward.1} parent=0 // pred_region
    _
  $region13: #{forward.1} parent=0 // pred_fallthru
    _
  // Predicated region
  $region14: #{forward.1} parent=0 // pred_check
    _
  $region15: #{forward.1} parent=0 // pred_check_branch
    %640 = sbr.rel (0) target = $region17
  $region16: #{forward.1} parent=0 // pred_region
    _
  $region17: #{forward.1} parent=0 // pred_fallthru
    _

</llo_original>
